<compile_context>
chip_gen: v6e
topology: v6e:2x2x1
jax: 0.10.0
libtpu: 0.0.40
codegen_flags: <defaults>
</compile_context>

<pallas_src>
import jax
import jax.numpy as jnp
import numpy as np
from jax.experimental import pallas as pl
from jax.experimental.pallas import tpu as pltpu


def _max4_kernel(y_ref, o_ref):
    """y_ref: (4, TR, L) f32 — the four 2x2-window taps, each a (TR, L) slab
    laid out exactly like the output block.  o_ref: (TR, L) f32.

    The pipeline is HBM-streaming bound, so the body is deliberately trivial
    (3 VPU maxes) and every store is compact and full lane width."""
    o_ref[...] = jnp.maximum(
        jnp.maximum(y_ref[0], y_ref[1]),
        jnp.maximum(y_ref[2], y_ref[3]),
    )


def _choose_fold(rows_nat, l_nat, target_lanes=512, max_lanes=4096):
    """Number of consecutive natural rows (each 2*Wh lanes) folded into one
    kernel row.  Any fold that divides rows_nat is a pure row-major view, so
    correctness never depends on the choice; we prefer a lane width near
    `target_lanes` that is a multiple of 128 (unmasked full-width vst)."""
    if l_nat >= target_lanes or rows_nat <= 1:
        return 1
    best_f = 1
    best_score = (1 if l_nat % 128 == 0 else 0, -abs(l_nat - target_lanes))
    max_f = min(rows_nat, max(1, max_lanes // l_nat))
    for f in range(2, max_f + 1):
        if rows_nat % f:
            continue
        lanes = l_nat * f
        score = (1 if lanes % 128 == 0 else 0, -abs(lanes - target_lanes))
        if score > best_score:
            best_score, best_f = score, f
    return best_f


def complex_pool(x, *, target_tile_bytes=6 << 20):
    """torch ComplexPool: complex(MaxPool2d(2,2)(x.real), MaxPool2d(2,2)(x.imag)).

    x: complex64 NCHW.  Returns complex64 (N, C, H//2, W//2)."""
    if x.dtype != jnp.complex64:
        # TODO(synk): complex128 would need f64 pooling, unsupported on TPU
        # vector units; only complex64 is implemented.
        raise TypeError(f"complex_pool expects complex64, got {x.dtype}")
    N, C, H, W = x.shape
    Hh, Wh = H // 2, W // 2
    if Hh == 0 or Wh == 0:
        raise ValueError("H and W must be >= 2 for 2x2/stride-2 pooling")

    # ---- pre-pass: one gather fusion (8B read + 8B write per input element;
    # possibly folded into the kernel's input DMA via allow_input_fusion). ----
    xc = x[:, :, : 2 * Hh, : 2 * Wh]                 # MaxPool2d floors odd H/W
    comps = jnp.stack([jnp.real(xc), jnp.imag(xc)], axis=-1)  # (N,C,2Hh,2Wh,2)
    taps = comps.reshape(N, C, Hh, 2, Wh, 2, 2)               # (n,c,i,u,j,v,s)
    taps = jnp.transpose(taps, (3, 5, 0, 1, 2, 4, 6))         # (u,v,n,c,i,j,s)

    rows_nat = N * C * Hh
    l_nat = 2 * Wh
    fold = _choose_fold(rows_nat, l_nat)
    R, L = rows_nat // fold, l_nat * fold
    y = taps.reshape(4, R, L)                        # pure row-major view

    # ---- row tiling ---------------------------------------------------------
    row_bytes_in = 4 * L * 4                         # 4 taps, f32
    rows_per_tile = max(1, target_tile_bytes // row_bytes_in)
    if R > rows_per_tile:
        tr = max(8, (rows_per_tile // 8) * 8)        # ~target-sized blocks
    elif R >= 32:
        # Whole input fits in one target-sized block; still split so the
        # pipeline has several steps and both v7x TensorCores get work.
        tr = max(8, (pl.cdiv(R, 4) // 8) * 8)
    else:
        tr = R                                       # full-dim block (legal)
    grid = (pl.cdiv(R, tr),)

    out2d = pl.pallas_call(
        _max4_kernel,
        grid=grid,
        in_specs=[pl.BlockSpec((4, tr, L), lambda i: (0, i, 0))],
        out_specs=pl.BlockSpec((tr, L), lambda i: (i, 0)),
        out_shape=jax.ShapeDtypeStruct((R, L), jnp.float32),
        compiler_params=pltpu.CompilerParams(
            dimension_semantics=("parallel",),
            # Allow XLA to fuse the deinterleave producer into the input
            # pipeline (drops the materialized intermediate when it succeeds).
            allow_input_fusion=[True],
            # v5e's default scoped VMEM limit is 16 MiB; ~15 MiB is in flight
            # at the default tile target, so raise the limit explicitly (still
            # well under v7x's 64 MiB physical VMEM).
            vmem_limit_bytes=32 * 1024 * 1024,
        ),
    )(y)

    # ---- epilogue: one fusion, f32 (re, im) pairs -> complex64 --------------
    # (Garbage never reaches here: partial last blocks only pad independent
    # rows, and the kernel writes every valid lane exactly once.)
    z = out2d.reshape(N, C, Hh, Wh, 2)
    return jax.lax.complex(z[..., 0], z[..., 1])


if __name__ == "__main__":
    key = jax.random.PRNGKey(0)
    kr, ki = jax.random.split(key)
    N, C, H, W = 2, 4, 16, 16
    re = jax.random.normal(kr, (N, C, H, W), dtype=jnp.float32)
    im = jax.random.normal(ki, (N, C, H, W), dtype=jnp.float32)
    x = jax.lax.complex(re, im)                      # complex64 NCHW input

    pooled = jax.block_until_ready(jax.jit(complex_pool)(x))

    # Reference: 2x2 / stride-2 max pool on real and imag parts (numpy).
    def ref_pool(p):
        p = np.asarray(p).reshape(N, C, H // 2, 2, W // 2, 2)
        return p.max(axis=(3, 5))

    ref = ref_pool(re) + 1j * ref_pool(im)
    np.testing.assert_allclose(np.asarray(pooled), ref, rtol=1e-6, atol=1e-6)
    assert pooled.shape == (N, C, H // 2, W // 2)
    assert pooled.dtype == jnp.complex64
    print("KERNEL_OK")
</pallas_src>

<mosaic_0001>
module attributes {stable_mosaic.version = 11 : i64} {
  func.func @_max4_kernel(%arg0: i32, %arg1: memref<4x2x512xf32, #tpu.memory_space<vmem>>, %arg2: memref<2x512xf32, #tpu.memory_space<vmem>>) attributes {dimension_semantics = [#tpu.dimension_semantics<parallel>], iteration_bounds = array<i64: 1>, scalar_prefetch = 0 : i64, scratch_operands = 0 : i64, tpu.core_type = #tpu.core_type<tc>, window_params = [{transform_indices = @transform_0, window_bounds = array<i64: 4, 2, 512>}, {transform_indices = @transform_1, window_bounds = array<i64: 2, 512>}]} {
    %c0 = arith.constant 0 : index
    %c0_0 = arith.constant 0 : index
    %c0_1 = arith.constant 0 : index
    %0 = vector.load %arg1[%c0, %c0_0, %c0_1] : memref<4x2x512xf32, #tpu.memory_space<vmem>>, vector<1x2x512xf32>
    %1 = vector.shape_cast %0 : vector<1x2x512xf32> to vector<2x512xf32>
    %c1 = arith.constant 1 : index
    %c0_2 = arith.constant 0 : index
    %c0_3 = arith.constant 0 : index
    %2 = vector.load %arg1[%c1, %c0_2, %c0_3] : memref<4x2x512xf32, #tpu.memory_space<vmem>>, vector<1x2x512xf32>
    %3 = vector.shape_cast %2 : vector<1x2x512xf32> to vector<2x512xf32>
    %4 = arith.maximumf %1, %3 : vector<2x512xf32>
    %c2 = arith.constant 2 : index
    %c0_4 = arith.constant 0 : index
    %c0_5 = arith.constant 0 : index
    %5 = vector.load %arg1[%c2, %c0_4, %c0_5] : memref<4x2x512xf32, #tpu.memory_space<vmem>>, vector<1x2x512xf32>
    %6 = vector.shape_cast %5 : vector<1x2x512xf32> to vector<2x512xf32>
    %c3 = arith.constant 3 : index
    %c0_6 = arith.constant 0 : index
    %c0_7 = arith.constant 0 : index
    %7 = vector.load %arg1[%c3, %c0_6, %c0_7] : memref<4x2x512xf32, #tpu.memory_space<vmem>>, vector<1x2x512xf32>
    %8 = vector.shape_cast %7 : vector<1x2x512xf32> to vector<2x512xf32>
    %9 = arith.maximumf %6, %8 : vector<2x512xf32>
    %10 = arith.maximumf %4, %9 : vector<2x512xf32>
    %c0_8 = arith.constant 0 : index
    %c0_9 = arith.constant 0 : index
    %11 = vector.load %arg2[%c0_8, %c0_9] : memref<2x512xf32, #tpu.memory_space<vmem>>, vector<2x512xf32>
    tpu.vector_store %arg2[%c0_8, %c0_9], %10 {strides = array<i32>} : memref<2x512xf32, #tpu.memory_space<vmem>>, vector<2x512xf32>,
    return
  }
  func.func @transform_0(%arg0: i32) -> (i32, i32, i32) {
    %c0_i32 = arith.constant 0 : i32
    %c0_i32_0 = arith.constant 0 : i32
    %c0_i32_1 = arith.constant 0 : i32
    return %c0_i32, %arg0, %c0_i32_0 : i32, i32, i32
  }
  func.func @transform_1(%arg0: i32) -> (i32, i32) {
    %c0_i32 = arith.constant 0 : i32
    %c0_i32_0 = arith.constant 0 : i32
    return %arg0, %c0_i32 : i32, i32
  }
}

</mosaic_0001>

<llo_original>
// kernel: custom-call
$region0: #{custom-call}
  %s0 = inlined_call_operand.hbm [shape: c64[2,4,16,16], index: 0, kind: input, shape index: {}]
  %s1 = inlined_call_operand.vmem [shape: f32[2,4,16,16], index: 1, kind: output, shape index: {}]
  $region1: #{custom-call} parent=0
    #allocation0 [shape = 's32[1]{0}', space=sflag, size = 0x4, scoped, tag = 'scoped memory for custom-call']
    %2 = vsyncpa [#allocation0], 0
    %s3 = sshll.u32 %s1, 4
    %s4 = int_to_ptr.vmem [resolvable:$true] %s3
    %6 = dma.hbm_to_vmem [thread:$0]  %s0, 2048, %s4, [#allocation0]
    %7 = dma.done [#allocation0], 2048
    %8 = vsyncpa [#allocation0], 1

// kernel: custom-call.1
$region0: #{custom-call.1}
  %s0 = inlined_call_operand.hbm [shape: c64[2,4,16,16], index: 0, kind: input, shape index: {}]
  %s1 = inlined_call_operand.vmem [shape: f32[2,4,16,16], index: 1, kind: output, shape index: {}]
  %s2 = scalar_lea.hbm %s0, 2048
  $region1: #{custom-call.1} parent=0
    #allocation0 [shape = 's32[1]{0}', space=sflag, size = 0x4, scoped, tag = 'scoped memory for custom-call.1']
    %3 = vsyncpa [#allocation0], 0
    %s4 = sshll.u32 %s1, 4
    %s5 = int_to_ptr.vmem [resolvable:$true] %s4
    %7 = dma.hbm_to_vmem [thread:$0]  %s2, 2048, %s5, [#allocation0]
    %8 = dma.done [#allocation0], 2048
    %9 = vsyncpa [#allocation0], 1

// kernel: complex_pool.1
$region0: #{complex_pool.1}
  #allocation0 [shape = 'u32[]', space=smem, size = 0x4, offset = 0x4, fixed_abs, tag = 'smem constant byte address 0x4 - core index']
  #allocation1 [shape = 'u32[144,128]{1,0:T(1,128)}', space=vmem, size = 0x12000, scoped, tag = 'internal scratch']
  %s0 = inlined_call_operand.vmem [shape: f32[4,2,512], index: 0, kind: input, shape index: {}]
  %s1 = inlined_call_operand.vmem [shape: f32[2,512], index: 1, kind: output, shape index: {}]
  %s2 = sld [smem:[#allocation0]]
  $region14: #{complex_pool.1} parent=0
    _
  %s4 = ssub.s32 1, %s2
  %s5 = scalar_select 0, %s4, %s2
  // Predicated region
  $region2: #{complex_pool.1} parent=0 // pred_check
    _
  $region3: #{complex_pool.1} parent=0 // pred_check_branch
    %7 = sbr.rel (0) target = $region5
  $region4: #{complex_pool.1} parent=0 // pred_region
    _
  $region5: #{complex_pool.1} parent=0 // pred_fallthru
    _
  %v8 = vld [vmem:[%s0] sm:$0xff]
  %s9 = scalar_lea.vmem %s0, 8
  %v10 = vld [vmem:[%s9] sm:$0xff]
  %v11 = vmax.f32 %v8, %v10
  %s12 = scalar_lea.vmem %s0, 16
  %v13 = vld [vmem:[%s12] sm:$0xff]
  %s14 = scalar_lea.vmem %s0, 24
  %v15 = vld [vmem:[%s14] sm:$0xff]
  %v16 = vmax.f32 %v13, %v15
  %v17 = vmax.f32 %v11, %v16
  %18 = vst [vmem:[%s1] sm:$0xff] %v17
  // Predicated region
  $region6: #{complex_pool.1} parent=0 // pred_check
    _
  $region7: #{complex_pool.1} parent=0 // pred_check_branch
    %20 = sbr.rel (0) target = $region9
  $region8: #{complex_pool.1} parent=0 // pred_region
    _
  $region9: #{complex_pool.1} parent=0 // pred_fallthru
    _
  // Predicated region
  $region10: #{complex_pool.1} parent=0 // pred_check
    _
  $region11: #{complex_pool.1} parent=0 // pred_check_branch
    %22 = sbr.rel (0) target = $region13
  $region12: #{complex_pool.1} parent=0 // pred_region
    _
  $region13: #{complex_pool.1} parent=0 // pred_fallthru
    _

// kernel: custom-call.2
$region0: #{custom-call.2}
  %s0 = inlined_call_operand.vmem [shape: f32[2,4,8,8], index: 0, kind: input, shape index: {}]
  %s1 = inlined_call_operand.vmem [shape: f32[2,4,8,8], index: 1, kind: input, shape index: {}]
  %s2 = inlined_call_operand.hbm [shape: c64[2,4,8,8], index: 2, kind: output, shape index: {}]
  %s3 = scalar_lea.hbm %s2, 1024
  $region1: #{custom-call.2} parent=0
    #allocation0 [shape = 's32[1]{0}', space=sflag, size = 0x4, scoped, tag = 'scoped memory for custom-call.2']
    %4 = vsyncpa [#allocation0], 0
    %s5 = sshll.u32 %s0, 4
    %s6 = int_to_ptr.vmem [resolvable:$true] %s5
    %8 = dma.vmem_to_hbm [thread:$0]  %s6, 1024, %s2, [#allocation0]
    %9 = dma.done [#allocation0], 1024
    %10 = vsyncpa [#allocation0], 1
  $region2: #{custom-call.2} parent=0
    #allocation1 [shape = 's32[1]{0}', space=sflag, size = 0x4, scoped, tag = 'scoped memory for custom-call.2']
    %11 = vsyncpa [#allocation1], 0
    %s12 = sshll.u32 %s1, 4
    %s13 = int_to_ptr.vmem [resolvable:$true] %s12
    %15 = dma.vmem_to_hbm [thread:$0]  %s13, 1024, %s3, [#allocation1]
    %16 = dma.done [#allocation1], 1024
    %17 = vsyncpa [#allocation1], 1

</llo_original>
